<compile_context>
chip_gen: v5e
topology: v5e:2x2
jax: 0.10.0
libtpu: 0.0.40
codegen_flags: <defaults>
</compile_context>

<pallas_src>
import jax
import jax.numpy as jnp
from jax.experimental import pallas as pl
from jax.experimental.pallas import tpu as pltpu


def cbow_kernel(idx_ref, ew1_ref, b1_ref, w2_ref, b2_ref, out_ref, h_ref):
    """One batch block: TB context rows -> (TB, V_pad) log-probs."""
    b = pl.program_id(0)
    TB = out_ref.shape[0]
    C = idx_ref.shape[1]

    # Embedding gather + context sum. lin1's weight is already folded into the
    # gather table, so each gathered row is a full (1, 128) vreg. TB and C are
    # static -> fully unrolled; the dynamic row loads can overlap.
    for r in range(TB):
        g = b * TB + r
        acc = ew1_ref[pl.ds(idx_ref[g, 0], 1), :]
        for c in range(1, C):
            acc = acc + ew1_ref[pl.ds(idx_ref[g, c], 1), :]
        h_ref[pl.ds(r, 1), :] = acc

    # lin1 bias + relu (lin1 weight already applied via the folded table).
    h = jnp.maximum(h_ref[...] + b1_ref[...], 0.0)

    # lin2 on the MXU: (TB, H) @ (H, V_pad).
    logits = jnp.dot(h, w2_ref[...], preferred_element_type=jnp.float32) + b2_ref[...]

    # log_softmax over the padded vocab axis; padded lanes carry a -1e30 bias
    # so exp(.) == 0 there and they drop out of the normalizer.
    m = jnp.max(logits, axis=1, keepdims=True)
    shifted = logits - m
    lse = jnp.log(jnp.sum(jnp.exp(shifted), axis=1, keepdims=True))
    out_ref[...] = shifted - lse


def cbow_forward(indices, emb, w1, b1, w2, b2, *, tb=8):
    """Batched CBOW forward. indices: (B, C) or (C,) int32 -> (B, V) log-probs."""
    indices = jnp.asarray(indices, jnp.int32)
    if indices.ndim == 1:
        indices = indices[None, :]
    B, C = indices.shape
    V, _D = emb.shape
    H = w1.shape[1]

    V_pad = ((V + 127) // 128) * 128
    B_pad = ((B + tb - 1) // tb) * tb

    # Clamp indices (OOB VMEM reads are unchecked on TPU) and pad batch rows.
    idx = jnp.clip(indices, 0, V - 1)
    idx = jnp.zeros((B_pad, C), jnp.int32).at[:B].set(idx)

    # Fold embedding table + lin1 weight into one lane-dense (V, H) gather table.
    ew1 = emb.astype(jnp.float32) @ w1.astype(jnp.float32)

    b1_p = b1.reshape(1, H).astype(jnp.float32)
    # Pad vocab dim: zero weight columns, -1e30 bias -> padded logits vanish.
    w2_p = jnp.zeros((H, V_pad), jnp.float32).at[:, :V].set(w2.astype(jnp.float32))
    b2_p = jnp.full((1, V_pad), -1e30, jnp.float32).at[0, :V].set(
        b2.reshape(-1).astype(jnp.float32))

    out = pl.pallas_call(
        cbow_kernel,
        out_shape=jax.ShapeDtypeStruct((B_pad, V_pad), jnp.float32),
        grid_spec=pltpu.PrefetchScalarGridSpec(
            num_scalar_prefetch=1,                       # context indices -> SMEM
            grid=(B_pad // tb,),
            in_specs=[
                pl.BlockSpec((V, H), lambda b, idx_ref: (0, 0)),       # folded emb@W1
                pl.BlockSpec((1, H), lambda b, idx_ref: (0, 0)),       # b1
                pl.BlockSpec((H, V_pad), lambda b, idx_ref: (0, 0)),   # W2 (padded)
                pl.BlockSpec((1, V_pad), lambda b, idx_ref: (0, 0)),   # b2 (padded)
            ],
            out_specs=pl.BlockSpec((tb, V_pad), lambda b, idx_ref: (b, 0)),
            scratch_shapes=[pltpu.VMEM((tb, H), jnp.float32)],
        ),
        compiler_params=pltpu.CompilerParams(
            dimension_semantics=("parallel",)),          # batch blocks across TCs (v7x)
    )(idx, ew1, b1_p, w2_p, b2_p)

    return out[:B, :V]


def cbow_reference(indices, emb, w1, b1, w2, b2):
    """Pure-JAX reference in the original op order (lookup-sum, lin1, relu, lin2)."""
    summed = jnp.sum(emb[indices], axis=1)                 # (B, D)
    h = jnp.maximum(summed @ w1 + b1, 0.0)                 # (B, H)
    logits = h @ w2 + b2                                   # (B, V)
    return logits - jax.scipy.special.logsumexp(logits, axis=1, keepdims=True)


if __name__ == "__main__":
    raw_text = (
        "We are about to study the idea of a computational process.\n"
        "Computational processes are abstract beings that inhabit computers.\n"
        "As they evolve, processes manipulate other abstract things called data.\n"
        "The evolution of a process is directed by a pattern of rules\n"
        "called a program. People create programs to direct processes. In effect,\n"
        "we conjure the spirits of the computer with our spells."
    ).split()

    vocab = sorted(set(raw_text))             # sorted for determinism
    vocab_size = len(vocab)                   # 49
    embedding_dim = 10
    hidden = 128
    word_to_ix = {w: i for i, w in enumerate(vocab)}

    # Deterministic parameter init (synthetic; not a checkpoint load).
    key = jax.random.PRNGKey(0)
    k_emb, k_w1, k_b1, k_w2, k_b2, k_batch = jax.random.split(key, 6)
    emb = jax.random.normal(k_emb, (vocab_size, embedding_dim), dtype=jnp.float32)
    w1 = jax.random.normal(k_w1, (embedding_dim, hidden), dtype=jnp.float32) * 0.1
    b1 = jax.random.normal(k_b1, (1, hidden), dtype=jnp.float32) * 0.1
    w2 = jax.random.normal(k_w2, (hidden, vocab_size), dtype=jnp.float32) * 0.1
    b2 = jax.random.normal(k_b2, (1, vocab_size), dtype=jnp.float32) * 0.1

    # 1) Original single-context forward (matches the PyTorch module call).
    context = ("We", "are", "to", "study")
    idx1 = jnp.array([[word_to_ix[w] for w in context]], dtype=jnp.int32)   # (1, 4)
    lp1 = jax.block_until_ready(cbow_forward(idx1, emb, w1, b1, w2, b2))
    ref1 = cbow_reference(idx1, emb, w1, b1, w2, b2)
    assert lp1.shape == (1, vocab_size)
    assert jnp.allclose(lp1, ref1, atol=1e-4), "single-context mismatch vs reference"

    # 2) Batched forward: 16 contexts -> 2 parallel grid steps of 8 rows each.
    idx16 = jax.random.randint(k_batch, (16, 4), 0, vocab_size, dtype=jnp.int32)
    lp16 = jax.block_until_ready(cbow_forward(idx16, emb, w1, b1, w2, b2))
    ref16 = cbow_reference(idx16, emb, w1, b1, w2, b2)
    assert lp16.shape == (16, vocab_size)
    assert jnp.allclose(lp16, ref16, atol=1e-4), "batched mismatch vs reference"

    print("KERNEL_OK")
</pallas_src>

<mosaic_0001>
module attributes {stable_mosaic.version = 11 : i64} {
  func.func @cbow_kernel(%arg0: i32, %arg1: memref<8x4xi32, #tpu.memory_space<smem>>, %arg2: memref<49x128xf32, #tpu.memory_space<vmem>>, %arg3: memref<1x128xf32, #tpu.memory_space<vmem>>, %arg4: memref<128x128xf32, #tpu.memory_space<vmem>>, %arg5: memref<1x128xf32, #tpu.memory_space<vmem>>, %arg6: memref<8x128xf32, #tpu.memory_space<vmem>>, %arg7: memref<8x128xf32, #tpu.memory_space<vmem>>) attributes {dimension_semantics = [#tpu.dimension_semantics<parallel>], iteration_bounds = array<i64: 1>, scalar_prefetch = 1 : i64, scratch_operands = 1 : i64, tpu.core_type = #tpu.core_type<tc>, window_params = [{pipeline_mode = #tpu.pipeline_mode<synchronous>, transform_indices = @transform_0, window_bounds = array<i64: 49, 128>}, {pipeline_mode = #tpu.pipeline_mode<synchronous>, transform_indices = @transform_1, window_bounds = array<i64: 1, 128>}, {pipeline_mode = #tpu.pipeline_mode<synchronous>, transform_indices = @transform_2, window_bounds = array<i64: 128, 128>}, {pipeline_mode = #tpu.pipeline_mode<synchronous>, transform_indices = @transform_3, window_bounds = array<i64: 1, 128>}, {transform_indices = @transform_4, window_bounds = array<i64: 8, 128>}]} {
    %c8_i32 = arith.constant 8 : i32
    %0 = arith.muli %arg0, %c8_i32 : i32
    %c0_i32 = arith.constant 0 : i32
    %1 = arith.addi %0, %c0_i32 : i32
    %2 = arith.index_cast %1 : i32 to index
    %c0 = arith.constant 0 : index
    %3 = memref.load %arg1[%2, %c0] : memref<8x4xi32, #tpu.memory_space<smem>>
    %4 = arith.index_cast %3 : i32 to index
    %c0_0 = arith.constant 0 : index
    %5 = vector.load %arg2[%4, %c0_0] : memref<49x128xf32, #tpu.memory_space<vmem>>, vector<1x128xf32>
    %6 = arith.index_cast %1 : i32 to index
    %c1 = arith.constant 1 : index
    %7 = memref.load %arg1[%6, %c1] : memref<8x4xi32, #tpu.memory_space<smem>>
    %8 = arith.index_cast %7 : i32 to index
    %c0_1 = arith.constant 0 : index
    %9 = vector.load %arg2[%8, %c0_1] : memref<49x128xf32, #tpu.memory_space<vmem>>, vector<1x128xf32>
    %10 = arith.addf %5, %9 : vector<1x128xf32>
    %11 = arith.index_cast %1 : i32 to index
    %c2 = arith.constant 2 : index
    %12 = memref.load %arg1[%11, %c2] : memref<8x4xi32, #tpu.memory_space<smem>>
    %13 = arith.index_cast %12 : i32 to index
    %c0_2 = arith.constant 0 : index
    %14 = vector.load %arg2[%13, %c0_2] : memref<49x128xf32, #tpu.memory_space<vmem>>, vector<1x128xf32>
    %15 = arith.addf %10, %14 : vector<1x128xf32>
    %16 = arith.index_cast %1 : i32 to index
    %c3 = arith.constant 3 : index
    %17 = memref.load %arg1[%16, %c3] : memref<8x4xi32, #tpu.memory_space<smem>>
    %18 = arith.index_cast %17 : i32 to index
    %c0_3 = arith.constant 0 : index
    %19 = vector.load %arg2[%18, %c0_3] : memref<49x128xf32, #tpu.memory_space<vmem>>, vector<1x128xf32>
    %20 = arith.addf %15, %19 : vector<1x128xf32>
    %c0_4 = arith.constant 0 : index
    %c0_5 = arith.constant 0 : index
    %21 = vector.load %arg7[%c0_4, %c0_5] : memref<8x128xf32, #tpu.memory_space<vmem>>, vector<1x128xf32>
    tpu.vector_store %arg7[%c0_4, %c0_5], %20 {strides = array<i32>} : memref<8x128xf32, #tpu.memory_space<vmem>>, vector<1x128xf32>,
    %c8_i32_6 = arith.constant 8 : i32
    %22 = arith.muli %arg0, %c8_i32_6 : i32
    %c1_i32 = arith.constant 1 : i32
    %23 = arith.addi %22, %c1_i32 : i32
    %24 = arith.index_cast %23 : i32 to index
    %c0_7 = arith.constant 0 : index
    %25 = memref.load %arg1[%24, %c0_7] : memref<8x4xi32, #tpu.memory_space<smem>>
    %26 = arith.index_cast %25 : i32 to index
    %c0_8 = arith.constant 0 : index
    %27 = vector.load %arg2[%26, %c0_8] : memref<49x128xf32, #tpu.memory_space<vmem>>, vector<1x128xf32>
    %28 = arith.index_cast %23 : i32 to index
    %c1_9 = arith.constant 1 : index
    %29 = memref.load %arg1[%28, %c1_9] : memref<8x4xi32, #tpu.memory_space<smem>>
    %30 = arith.index_cast %29 : i32 to index
    %c0_10 = arith.constant 0 : index
    %31 = vector.load %arg2[%30, %c0_10] : memref<49x128xf32, #tpu.memory_space<vmem>>, vector<1x128xf32>
    %32 = arith.addf %27, %31 : vector<1x128xf32>
    %33 = arith.index_cast %23 : i32 to index
    %c2_11 = arith.constant 2 : index
    %34 = memref.load %arg1[%33, %c2_11] : memref<8x4xi32, #tpu.memory_space<smem>>
    %35 = arith.index_cast %34 : i32 to index
    %c0_12 = arith.constant 0 : index
    %36 = vector.load %arg2[%35, %c0_12] : memref<49x128xf32, #tpu.memory_space<vmem>>, vector<1x128xf32>
    %37 = arith.addf %32, %36 : vector<1x128xf32>
    %38 = arith.index_cast %23 : i32 to index
    %c3_13 = arith.constant 3 : index
    %39 = memref.load %arg1[%38, %c3_13] : memref<8x4xi32, #tpu.memory_space<smem>>
    %40 = arith.index_cast %39 : i32 to index
    %c0_14 = arith.constant 0 : index
    %41 = vector.load %arg2[%40, %c0_14] : memref<49x128xf32, #tpu.memory_space<vmem>>, vector<1x128xf32>
    %42 = arith.addf %37, %41 : vector<1x128xf32>
    %c1_15 = arith.constant 1 : index
    %c0_16 = arith.constant 0 : index
    %43 = vector.load %arg7[%c1_15, %c0_16] : memref<8x128xf32, #tpu.memory_space<vmem>>, vector<1x128xf32>
    tpu.vector_store %arg7[%c1_15, %c0_16], %42 {strides = array<i32>} : memref<8x128xf32, #tpu.memory_space<vmem>>, vector<1x128xf32>,
    %c8_i32_17 = arith.constant 8 : i32
    %44 = arith.muli %arg0, %c8_i32_17 : i32
    %c2_i32 = arith.constant 2 : i32
    %45 = arith.addi %44, %c2_i32 : i32
    %46 = arith.index_cast %45 : i32 to index
    %c0_18 = arith.constant 0 : index
    %47 = memref.load %arg1[%46, %c0_18] : memref<8x4xi32, #tpu.memory_space<smem>>
    %48 = arith.index_cast %47 : i32 to index
    %c0_19 = arith.constant 0 : index
    %49 = vector.load %arg2[%48, %c0_19] : memref<49x128xf32, #tpu.memory_space<vmem>>, vector<1x128xf32>
    %50 = arith.index_cast %45 : i32 to index
    %c1_20 = arith.constant 1 : index
    %51 = memref.load %arg1[%50, %c1_20] : memref<8x4xi32, #tpu.memory_space<smem>>
    %52 = arith.index_cast %51 : i32 to index
    %c0_21 = arith.constant 0 : index
    %53 = vector.load %arg2[%52, %c0_21] : memref<49x128xf32, #tpu.memory_space<vmem>>, vector<1x128xf32>
    %54 = arith.addf %49, %53 : vector<1x128xf32>
    %55 = arith.index_cast %45 : i32 to index
    %c2_22 = arith.constant 2 : index
    %56 = memref.load %arg1[%55, %c2_22] : memref<8x4xi32, #tpu.memory_space<smem>>
    %57 = arith.index_cast %56 : i32 to index
    %c0_23 = arith.constant 0 : index
    %58 = vector.load %arg2[%57, %c0_23] : memref<49x128xf32, #tpu.memory_space<vmem>>, vector<1x128xf32>
    %59 = arith.addf %54, %58 : vector<1x128xf32>
    %60 = arith.index_cast %45 : i32 to index
    %c3_24 = arith.constant 3 : index
    %61 = memref.load %arg1[%60, %c3_24] : memref<8x4xi32, #tpu.memory_space<smem>>
    %62 = arith.index_cast %61 : i32 to index
    %c0_25 = arith.constant 0 : index
    %63 = vector.load %arg2[%62, %c0_25] : memref<49x128xf32, #tpu.memory_space<vmem>>, vector<1x128xf32>
    %64 = arith.addf %59, %63 : vector<1x128xf32>
    %c2_26 = arith.constant 2 : index
    %c0_27 = arith.constant 0 : index
    %65 = vector.load %arg7[%c2_26, %c0_27] : memref<8x128xf32, #tpu.memory_space<vmem>>, vector<1x128xf32>
    tpu.vector_store %arg7[%c2_26, %c0_27], %64 {strides = array<i32>} : memref<8x128xf32, #tpu.memory_space<vmem>>, vector<1x128xf32>,
    %c8_i32_28 = arith.constant 8 : i32
    %66 = arith.muli %arg0, %c8_i32_28 : i32
    %c3_i32 = arith.constant 3 : i32
    %67 = arith.addi %66, %c3_i32 : i32
    %68 = arith.index_cast %67 : i32 to index
    %c0_29 = arith.constant 0 : index
    %69 = memref.load %arg1[%68, %c0_29] : memref<8x4xi32, #tpu.memory_space<smem>>
    %70 = arith.index_cast %69 : i32 to index
    %c0_30 = arith.constant 0 : index
    %71 = vector.load %arg2[%70, %c0_30] : memref<49x128xf32, #tpu.memory_space<vmem>>, vector<1x128xf32>
    %72 = arith.index_cast %67 : i32 to index
    %c1_31 = arith.constant 1 : index
    %73 = memref.load %arg1[%72, %c1_31] : memref<8x4xi32, #tpu.memory_space<smem>>
    %74 = arith.index_cast %73 : i32 to index
    %c0_32 = arith.constant 0 : index
    %75 = vector.load %arg2[%74, %c0_32] : memref<49x128xf32, #tpu.memory_space<vmem>>, vector<1x128xf32>
    %76 = arith.addf %71, %75 : vector<1x128xf32>
    %77 = arith.index_cast %67 : i32 to index
    %c2_33 = arith.constant 2 : index
    %78 = memref.load %arg1[%77, %c2_33] : memref<8x4xi32, #tpu.memory_space<smem>>
    %79 = arith.index_cast %78 : i32 to index
    %c0_34 = arith.constant 0 : index
    %80 = vector.load %arg2[%79, %c0_34] : memref<49x128xf32, #tpu.memory_space<vmem>>, vector<1x128xf32>
    %81 = arith.addf %76, %80 : vector<1x128xf32>
    %82 = arith.index_cast %67 : i32 to index
    %c3_35 = arith.constant 3 : index
    %83 = memref.load %arg1[%82, %c3_35] : memref<8x4xi32, #tpu.memory_space<smem>>
    %84 = arith.index_cast %83 : i32 to index
    %c0_36 = arith.constant 0 : index
    %85 = vector.load %arg2[%84, %c0_36] : memref<49x128xf32, #tpu.memory_space<vmem>>, vector<1x128xf32>
    %86 = arith.addf %81, %85 : vector<1x128xf32>
    %c3_37 = arith.constant 3 : index
    %c0_38 = arith.constant 0 : index
    %87 = vector.load %arg7[%c3_37, %c0_38] : memref<8x128xf32, #tpu.memory_space<vmem>>, vector<1x128xf32>
    tpu.vector_store %arg7[%c3_37, %c0_38], %86 {strides = array<i32>} : memref<8x128xf32, #tpu.memory_space<vmem>>, vector<1x128xf32>,
    %c8_i32_39 = arith.constant 8 : i32
    %88 = arith.muli %arg0, %c8_i32_39 : i32
    %c4_i32 = arith.constant 4 : i32
    %89 = arith.addi %88, %c4_i32 : i32
    %90 = arith.index_cast %89 : i32 to index
    %c0_40 = arith.constant 0 : index
    %91 = memref.load %arg1[%90, %c0_40] : memref<8x4xi32, #tpu.memory_space<smem>>
    %92 = arith.index_cast %91 : i32 to index
    %c0_41 = arith.constant 0 : index
    %93 = vector.load %arg2[%92, %c0_41] : memref<49x128xf32, #tpu.memory_space<vmem>>, vector<1x128xf32>
    %94 = arith.index_cast %89 : i32 to index
    %c1_42 = arith.constant 1 : index
    %95 = memref.load %arg1[%94, %c1_42] : memref<8x4xi32, #tpu.memory_space<smem>>
    %96 = arith.index_cast %95 : i32 to index
    %c0_43 = arith.constant 0 : index
    %97 = vector.load %arg2[%96, %c0_43] : memref<49x128xf32, #tpu.memory_space<vmem>>, vector<1x128xf32>
    %98 = arith.addf %93, %97 : vector<1x128xf32>
    %99 = arith.index_cast %89 : i32 to index
    %c2_44 = arith.constant 2 : index
    %100 = memref.load %arg1[%99, %c2_44] : memref<8x4xi32, #tpu.memory_space<smem>>
    %101 = arith.index_cast %100 : i32 to index
    %c0_45 = arith.constant 0 : index
    %102 = vector.load %arg2[%101, %c0_45] : memref<49x128xf32, #tpu.memory_space<vmem>>, vector<1x128xf32>
    %103 = arith.addf %98, %102 : vector<1x128xf32>
    %104 = arith.index_cast %89 : i32 to index
    %c3_46 = arith.constant 3 : index
    %105 = memref.load %arg1[%104, %c3_46] : memref<8x4xi32, #tpu.memory_space<smem>>
    %106 = arith.index_cast %105 : i32 to index
    %c0_47 = arith.constant 0 : index
    %107 = vector.load %arg2[%106, %c0_47] : memref<49x128xf32, #tpu.memory_space<vmem>>, vector<1x128xf32>
    %108 = arith.addf %103, %107 : vector<1x128xf32>
    %c4 = arith.constant 4 : index
    %c0_48 = arith.constant 0 : index
    %109 = vector.load %arg7[%c4, %c0_48] : memref<8x128xf32, #tpu.memory_space<vmem>>, vector<1x128xf32>
    tpu.vector_store %arg7[%c4, %c0_48], %108 {strides = array<i32>} : memref<8x128xf32, #tpu.memory_space<vmem>>, vector<1x128xf32>,
    %c8_i32_49 = arith.constant 8 : i32
    %110 = arith.muli %arg0, %c8_i32_49 : i32
    %c5_i32 = arith.constant 5 : i32
    %111 = arith.addi %110, %c5_i32 : i32
    %112 = arith.index_cast %111 : i32 to index
    %c0_50 = arith.constant 0 : index
    %113 = memref.load %arg1[%112, %c0_50] : memref<8x4xi32, #tpu.memory_space<smem>>
    %114 = arith.index_cast %113 : i32 to index
    %c0_51 = arith.constant 0 : index
    %115 = vector.load %arg2[%114, %c0_51] : memref<49x128xf32, #tpu.memory_space<vmem>>, vector<1x128xf32>
    %116 = arith.index_cast %111 : i32 to index
    %c1_52 = arith.constant 1 : index
    %117 = memref.load %arg1[%116, %c1_52] : memref<8x4xi32, #tpu.memory_space<smem>>
    %118 = arith.index_cast %117 : i32 to index
    %c0_53 = arith.constant 0 : index
    %119 = vector.load %arg2[%118, %c0_53] : memref<49x128xf32, #tpu.memory_space<vmem>>, vector<1x128xf32>
    %120 = arith.addf %115, %119 : vector<1x128xf32>
    %121 = arith.index_cast %111 : i32 to index
    %c2_54 = arith.constant 2 : index
    %122 = memref.load %arg1[%121, %c2_54] : memref<8x4xi32, #tpu.memory_space<smem>>
    %123 = arith.index_cast %122 : i32 to index
    %c0_55 = arith.constant 0 : index
    %124 = vector.load %arg2[%123, %c0_55] : memref<49x128xf32, #tpu.memory_space<vmem>>, vector<1x128xf32>
    %125 = arith.addf %120, %124 : vector<1x128xf32>
    %126 = arith.index_cast %111 : i32 to index
    %c3_56 = arith.constant 3 : index
    %127 = memref.load %arg1[%126, %c3_56] : memref<8x4xi32, #tpu.memory_space<smem>>
    %128 = arith.index_cast %127 : i32 to index
    %c0_57 = arith.constant 0 : index
    %129 = vector.load %arg2[%128, %c0_57] : memref<49x128xf32, #tpu.memory_space<vmem>>, vector<1x128xf32>
    %130 = arith.addf %125, %129 : vector<1x128xf32>
    %c5 = arith.constant 5 : index
    %c0_58 = arith.constant 0 : index
    %131 = vector.load %arg7[%c5, %c0_58] : memref<8x128xf32, #tpu.memory_space<vmem>>, vector<1x128xf32>
    tpu.vector_store %arg7[%c5, %c0_58], %130 {strides = array<i32>} : memref<8x128xf32, #tpu.memory_space<vmem>>, vector<1x128xf32>,
    %c8_i32_59 = arith.constant 8 : i32
    %132 = arith.muli %arg0, %c8_i32_59 : i32
    %c6_i32 = arith.constant 6 : i32
    %133 = arith.addi %132, %c6_i32 : i32
    %134 = arith.index_cast %133 : i32 to index
    %c0_60 = arith.constant 0 : index
    %135 = memref.load %arg1[%134, %c0_60] : memref<8x4xi32, #tpu.memory_space<smem>>
    %136 = arith.index_cast %135 : i32 to index
    %c0_61 = arith.constant 0 : index
    %137 = vector.load %arg2[%136, %c0_61] : memref<49x128xf32, #tpu.memory_space<vmem>>, vector<1x128xf32>
    %138 = arith.index_cast %133 : i32 to index
    %c1_62 = arith.constant 1 : index
    %139 = memref.load %arg1[%138, %c1_62] : memref<8x4xi32, #tpu.memory_space<smem>>
    %140 = arith.index_cast %139 : i32 to index
    %c0_63 = arith.constant 0 : index
    %141 = vector.load %arg2[%140, %c0_63] : memref<49x128xf32, #tpu.memory_space<vmem>>, vector<1x128xf32>
    %142 = arith.addf %137, %141 : vector<1x128xf32>
    %143 = arith.index_cast %133 : i32 to index
    %c2_64 = arith.constant 2 : index
    %144 = memref.load %arg1[%143, %c2_64] : memref<8x4xi32, #tpu.memory_space<smem>>
    %145 = arith.index_cast %144 : i32 to index
    %c0_65 = arith.constant 0 : index
    %146 = vector.load %arg2[%145, %c0_65] : memref<49x128xf32, #tpu.memory_space<vmem>>, vector<1x128xf32>
    %147 = arith.addf %142, %146 : vector<1x128xf32>
    %148 = arith.index_cast %133 : i32 to index
    %c3_66 = arith.constant 3 : index
    %149 = memref.load %arg1[%148, %c3_66] : memref<8x4xi32, #tpu.memory_space<smem>>
    %150 = arith.index_cast %149 : i32 to index
    %c0_67 = arith.constant 0 : index
    %151 = vector.load %arg2[%150, %c0_67] : memref<49x128xf32, #tpu.memory_space<vmem>>, vector<1x128xf32>
    %152 = arith.addf %147, %151 : vector<1x128xf32>
    %c6 = arith.constant 6 : index
    %c0_68 = arith.constant 0 : index
    %153 = vector.load %arg7[%c6, %c0_68] : memref<8x128xf32, #tpu.memory_space<vmem>>, vector<1x128xf32>
    tpu.vector_store %arg7[%c6, %c0_68], %152 {strides = array<i32>} : memref<8x128xf32, #tpu.memory_space<vmem>>, vector<1x128xf32>,
    %c8_i32_69 = arith.constant 8 : i32
    %154 = arith.muli %arg0, %c8_i32_69 : i32
    %c7_i32 = arith.constant 7 : i32
    %155 = arith.addi %154, %c7_i32 : i32
    %156 = arith.index_cast %155 : i32 to index
    %c0_70 = arith.constant 0 : index
    %157 = memref.load %arg1[%156, %c0_70] : memref<8x4xi32, #tpu.memory_space<smem>>
    %158 = arith.index_cast %157 : i32 to index
    %c0_71 = arith.constant 0 : index
    %159 = vector.load %arg2[%158, %c0_71] : memref<49x128xf32, #tpu.memory_space<vmem>>, vector<1x128xf32>
    %160 = arith.index_cast %155 : i32 to index
    %c1_72 = arith.constant 1 : index
    %161 = memref.load %arg1[%160, %c1_72] : memref<8x4xi32, #tpu.memory_space<smem>>
    %162 = arith.index_cast %161 : i32 to index
    %c0_73 = arith.constant 0 : index
    %163 = vector.load %arg2[%162, %c0_73] : memref<49x128xf32, #tpu.memory_space<vmem>>, vector<1x128xf32>
    %164 = arith.addf %159, %163 : vector<1x128xf32>
    %165 = arith.index_cast %155 : i32 to index
    %c2_74 = arith.constant 2 : index
    %166 = memref.load %arg1[%165, %c2_74] : memref<8x4xi32, #tpu.memory_space<smem>>
    %167 = arith.index_cast %166 : i32 to index
    %c0_75 = arith.constant 0 : index
    %168 = vector.load %arg2[%167, %c0_75] : memref<49x128xf32, #tpu.memory_space<vmem>>, vector<1x128xf32>
    %169 = arith.addf %164, %168 : vector<1x128xf32>
    %170 = arith.index_cast %155 : i32 to index
    %c3_76 = arith.constant 3 : index
    %171 = memref.load %arg1[%170, %c3_76] : memref<8x4xi32, #tpu.memory_space<smem>>
    %172 = arith.index_cast %171 : i32 to index
    %c0_77 = arith.constant 0 : index
    %173 = vector.load %arg2[%172, %c0_77] : memref<49x128xf32, #tpu.memory_space<vmem>>, vector<1x128xf32>
    %174 = arith.addf %169, %173 : vector<1x128xf32>
    %c7 = arith.constant 7 : index
    %c0_78 = arith.constant 0 : index
    %175 = vector.load %arg7[%c7, %c0_78] : memref<8x128xf32, #tpu.memory_space<vmem>>, vector<1x128xf32>
    tpu.vector_store %arg7[%c7, %c0_78], %174 {strides = array<i32>} : memref<8x128xf32, #tpu.memory_space<vmem>>, vector<1x128xf32>,
    %c0_79 = arith.constant 0 : index
    %c0_80 = arith.constant 0 : index
    %176 = vector.load %arg7[%c0_79, %c0_80] : memref<8x128xf32, #tpu.memory_space<vmem>>, vector<8x128xf32>
    %c0_81 = arith.constant 0 : index
    %c0_82 = arith.constant 0 : index
    %177 = vector.load %arg3[%c0_81, %c0_82] : memref<1x128xf32, #tpu.memory_space<vmem>>, vector<1x128xf32>
    %178 = vector.broadcast %177 : vector<1x128xf32> to vector<8x128xf32>
    %179 = arith.addf %176, %178 : vector<8x128xf32>
    %cst = arith.constant 0.000000e+00 : f32
    %180 = vector.broadcast %cst : f32 to vector<8x128xf32>
    %181 = arith.maximumf %179, %180 : vector<8x128xf32>
    %c0_83 = arith.constant 0 : index
    %c0_84 = arith.constant 0 : index
    %182 = vector.load %arg4[%c0_83, %c0_84] : memref<128x128xf32, #tpu.memory_space<vmem>>, vector<128x128xf32>
    %cst_85 = arith.constant dense<0.000000e+00> : vector<8x128xf32>
    %183 = tpu.matmul %181, %182, %cst_85 {dimension_numbers = #tpu.dot_dimension_numbers<[1], [0], [0], [1], [0, 0, 1, 1], [], []>} : vector<8x128xf32>, vector<128x128xf32>, vector<8x128xf32> -> vector<8x128xf32>
    %c0_86 = arith.constant 0 : index
    %c0_87 = arith.constant 0 : index
    %184 = vector.load %arg5[%c0_86, %c0_87] : memref<1x128xf32, #tpu.memory_space<vmem>>, vector<1x128xf32>
    %185 = vector.broadcast %184 : vector<1x128xf32> to vector<8x128xf32>
    %186 = arith.addf %183, %185 : vector<8x128xf32>
    %cst_88 = arith.constant dense<0xFF800000> : vector<8xf32>
    %187 = vector.multi_reduction <maximumf>, %186, %cst_88 [1] : vector<8x128xf32> to vector<8xf32>
    %188 = vector.shape_cast %187 : vector<8xf32> to vector<8x1xf32>
    %189 = vector.broadcast %188 : vector<8x1xf32> to vector<8x128xf32>
    %190 = arith.subf %186, %189 : vector<8x128xf32>
    %191 = math.exp %190 : vector<8x128xf32>
    %cst_89 = arith.constant dense<0.000000e+00> : vector<8xf32>
    %192 = vector.multi_reduction <add>, %191, %cst_89 [1] : vector<8x128xf32> to vector<8xf32>
    %193 = vector.shape_cast %192 : vector<8xf32> to vector<8x1xf32>
    %194 = math.log %193 : vector<8x1xf32>
    %195 = vector.broadcast %194 : vector<8x1xf32> to vector<8x128xf32>
    %196 = arith.subf %190, %195 : vector<8x128xf32>
    %c0_90 = arith.constant 0 : index
    %c0_91 = arith.constant 0 : index
    %197 = vector.load %arg6[%c0_90, %c0_91] : memref<8x128xf32, #tpu.memory_space<vmem>>, vector<8x128xf32>
    tpu.vector_store %arg6[%c0_90, %c0_91], %196 {strides = array<i32>} : memref<8x128xf32, #tpu.memory_space<vmem>>, vector<8x128xf32>,
    return
  }
  func.func @transform_0(%arg0: i32, %arg1: memref<8x4xi32, #tpu.memory_space<smem>>) -> (i32, i32) {
    %c0_i32 = arith.constant 0 : i32
    %c0_i32_0 = arith.constant 0 : i32
    %c0_i32_1 = arith.constant 0 : i32
    return %c0_i32, %c0_i32_0 : i32, i32
  }
  func.func @transform_1(%arg0: i32, %arg1: memref<8x4xi32, #tpu.memory_space<smem>>) -> (i32, i32) {
    %c0_i32 = arith.constant 0 : i32
    %c0_i32_0 = arith.constant 0 : i32
    %c0_i32_1 = arith.constant 0 : i32
    return %c0_i32, %c0_i32_0 : i32, i32
  }
  func.func @transform_2(%arg0: i32, %arg1: memref<8x4xi32, #tpu.memory_space<smem>>) -> (i32, i32) {
    %c0_i32 = arith.constant 0 : i32
    %c0_i32_0 = arith.constant 0 : i32
    %c0_i32_1 = arith.constant 0 : i32
    return %c0_i32, %c0_i32_0 : i32, i32
  }
  func.func @transform_3(%arg0: i32, %arg1: memref<8x4xi32, #tpu.memory_space<smem>>) -> (i32, i32) {
    %c0_i32 = arith.constant 0 : i32
    %c0_i32_0 = arith.constant 0 : i32
    %c0_i32_1 = arith.constant 0 : i32
    return %c0_i32, %c0_i32_0 : i32, i32
  }
  func.func @transform_4(%arg0: i32, %arg1: memref<8x4xi32, #tpu.memory_space<smem>>) -> (i32, i32) {
    %c0_i32 = arith.constant 0 : i32
    %c0_i32_0 = arith.constant 0 : i32
    return %arg0, %c0_i32 : i32, i32
  }
}

</mosaic_0001>

<llo_original>
// kernel: tpu_custom_call.1
$region0: #{tpu_custom_call.1}
  #allocation0 [shape = 'u32[]', space=smem, size = 0x4, offset = 0x4, fixed_abs, tag = 'smem constant byte address 0x4 - core index']
  #allocation1 [shape = 'u32[72,128]{1,0:T(1,128)}', space=vmem, size = 0x9000, scoped, tag = 'internal scratch']
  #allocation2 [shape = 'f32[8,128]{1,0:T(8,128)}', space=vmem, size = 0x1000, scoped, tag = 'scratch operand']
  #allocation3 [shape = 's32[1]{0}', space=sflag, size = 0x4, scoped, tag = 'scoped memory for tpu_custom_call.1']
  #allocation4 [shape = 'u8[4096]{0}', space=smem, size = 0x1000, scoped, tag = 'prefetched SMEM operand 0']
  %s0 = inlined_call_operand.vmem [shape: s32[8,4], index: 0, kind: input, shape index: {}]
  %s1 = inlined_call_operand.hbm [shape: f32[49,128], index: 1, kind: input, shape index: {}]
  %s2 = inlined_call_operand.vmem [shape: f32[1,128], index: 2, kind: input, shape index: {}]
  %s3 = inlined_call_operand.hbm [shape: f32[128,128], index: 3, kind: input, shape index: {}]
  %s4 = inlined_call_operand.vmem [shape: f32[1,128], index: 4, kind: input, shape index: {}]
  %s5 = inlined_call_operand.hbm [shape: f32[8,128], index: 5, kind: output, shape index: {}]
  %s6 = sld [smem:[#allocation0]]
  $region34: #{tpu_custom_call.1} parent=0
    _
  %s8 = ssub.s32 1, %s6
  %s9 = scalar_select 0, %s8, %s6
  %s11 = sshll.u32 %s0, 4
  %s12 = int_to_ptr.vmem [resolvable:$true] %s11
  %14 = dma.vmem_to_smem %s12, 128, [#allocation4], [#allocation3]
  %16 = dma.done [#allocation3], 128
  %17 = sfence
  $region1: #{tpu_custom_call.1} parent=0
    #allocation5 [shape = 'u8[28672]{0}', space=vmem, size = 0x7000, scoped, tag = 'input window, operand 1, single buffered']
    #allocation6 [shape = 's32[1]{0}', space=sflag, size = 0x4, scoped, tag = 'scoped memory for tpu_custom_call.1']
    #allocation7 [shape = 's32[1]{0}', space=sflag, size = 0x4, scoped, tag = 'scoped memory for tpu_custom_call.1']
    #allocation8 [shape = 'u8[65536]{0}', space=vmem, size = 0x10000, scoped, tag = 'input window, operand 3, single buffered']
    #allocation9 [shape = 's32[1]{0}', space=sflag, size = 0x4, scoped, tag = 'scoped memory for tpu_custom_call.1']
    #allocation10 [shape = 'u8[4096]{0}', space=vmem, size = 0x1000, scoped, tag = 'output window, operand 0, single buffered']
    %18 = vsyncpa [#allocation6], 0
    %19 = vsyncpa [#allocation9], 0
    %20 = vsyncpa [#allocation7], 0
    // Predicated region
    $region2: #{tpu_custom_call.1} parent=1 // pred_check
      _
    $region3: #{tpu_custom_call.1} parent=1 // pred_check_branch
      %22 = sbr.rel (0) target = $region5
    $region4: #{tpu_custom_call.1} parent=1 // pred_region
      %24 = vsyncadd [#allocation6], 0
      %s25 = sshll.u32 %s1, 4
      %s26 = int_to_ptr.hbm [resolvable:$true] %s25
      %s27 = sshll.u32 [#allocation5], 4
      %s28 = int_to_ptr.vmem [resolvable:$true] %s27
      %33 = dma.hbm_to_vmem [thread:$0]  %s26, 896, %s28, [#allocation6], 128, 128, 8
    $region5: #{tpu_custom_call.1} parent=1 // pred_fallthru
      _
    // Predicated region
    $region6: #{tpu_custom_call.1} parent=1 // pred_check
      _
    $region7: #{tpu_custom_call.1} parent=1 // pred_check_branch
      %35 = sbr.rel (0) target = $region9
    $region8: #{tpu_custom_call.1} parent=1 // pred_region
      _
    $region9: #{tpu_custom_call.1} parent=1 // pred_fallthru
      _
    // Predicated region
    $region10: #{tpu_custom_call.1} parent=1 // pred_check
      _
    $region11: #{tpu_custom_call.1} parent=1 // pred_check_branch
      %37 = sbr.rel (0) target = $region13
    $region12: #{tpu_custom_call.1} parent=1 // pred_region
      %39 = vsyncadd [#allocation9], 0
      %s40 = sshll.u32 %s3, 4
      %s41 = int_to_ptr.hbm [resolvable:$true] %s40
      %s42 = sshll.u32 [#allocation8], 4
      %s43 = int_to_ptr.vmem [resolvable:$true] %s42
      %48 = dma.hbm_to_vmem [thread:$0]  %s41, 2048, %s43, [#allocation9], 128, 128, 8
    $region13: #{tpu_custom_call.1} parent=1 // pred_fallthru
      _
    // Predicated region
    $region14: #{tpu_custom_call.1} parent=1 // pred_check
      _
    $region15: #{tpu_custom_call.1} parent=1 // pred_check_branch
      %50 = sbr.rel (0) target = $region17
    $region16: #{tpu_custom_call.1} parent=1 // pred_region
      _
    $region17: #{tpu_custom_call.1} parent=1 // pred_fallthru
      _
    // Predicated region
    $region18: #{tpu_custom_call.1} parent=1 // pred_check
      _
    $region19: #{tpu_custom_call.1} parent=1 // pred_check_branch
      %52 = sbr.rel (0) target = $region21
    $region20: #{tpu_custom_call.1} parent=1 // pred_region
      %54 = dma.done [#allocation6], 896
    $region21: #{tpu_custom_call.1} parent=1 // pred_fallthru
      _
    // Predicated region
    $region22: #{tpu_custom_call.1} parent=1 // pred_check
      _
    $region23: #{tpu_custom_call.1} parent=1 // pred_check_branch
      %56 = sbr.rel (0) target = $region25
    $region24: #{tpu_custom_call.1} parent=1 // pred_region
      %58 = dma.done [#allocation9], 2048
    $region25: #{tpu_custom_call.1} parent=1 // pred_fallthru
      _
    %s59 = smul.u32 0, 8
    %s60 = smul.u32 %s59, 128
    %s61 = sld [smem:[#allocation4 + %s60]]
    %s62 = scalar_lea.vmem [#allocation5], %s61
    %v63 = vld [vmem:[%s62] sm:$0x1]
    %s64 = sadd.s32 %s60, 1
    %s65 = sld [smem:[#allocation4 + %s64]]
    %s66 = scalar_lea.vmem [#allocation5], %s65
    %v67 = vld [vmem:[%s66] sm:$0x1]
    %v68 = vadd.f32 %v63, %v67
    %s69 = sadd.s32 %s60, 2
    %s70 = sld [smem:[#allocation4 + %s69]]
    %s71 = scalar_lea.vmem [#allocation5], %s70
    %v72 = vld [vmem:[%s71] sm:$0x1]
    %v73 = vadd.f32 %v68, %v72
    %s74 = sadd.s32 %s60, 3
    %s75 = sld [smem:[#allocation4 + %s74]]
    %s76 = scalar_lea.vmem [#allocation5], %s75
    %v77 = vld [vmem:[%s76] sm:$0x1]
    %v78 = vadd.f32 %v73, %v77
    %79 = vst [vmem:[#allocation2] sm:$0x1] %v78
    %s80 = sadd.s32 %s59, 1
    %s81 = smul.u32 %s80, 128
    %s82 = sld [smem:[#allocation4 + %s81]]
    %s83 = scalar_lea.vmem [#allocation5], %s82
    %v84 = vld [vmem:[%s83] sm:$0x1]
    %s85 = sadd.s32 %s81, 1
    %s86 = sld [smem:[#allocation4 + %s85]]
    %s87 = scalar_lea.vmem [#allocation5], %s86
    %v88 = vld [vmem:[%s87] sm:$0x1]
    %v89 = vadd.f32 %v84, %v88
    %s90 = sadd.s32 %s81, 2
    %s91 = sld [smem:[#allocation4 + %s90]]
    %s92 = scalar_lea.vmem [#allocation5], %s91
    %v93 = vld [vmem:[%s92] sm:$0x1]
    %v94 = vadd.f32 %v89, %v93
    %s95 = sadd.s32 %s81, 3
    %s96 = sld [smem:[#allocation4 + %s95]]
    %s97 = scalar_lea.vmem [#allocation5], %s96
    %v98 = vld [vmem:[%s97] sm:$0x1]
    %v99 = vadd.f32 %v94, %v98
    %100 = vst [vmem:[#allocation2 + $0x1] sm:$0x1] %v99
    %s101 = sadd.s32 %s59, 2
    %s102 = smul.u32 %s101, 128
    %s103 = sld [smem:[#allocation4 + %s102]]
    %s104 = scalar_lea.vmem [#allocation5], %s103
    %v105 = vld [vmem:[%s104] sm:$0x1]
    %s106 = sadd.s32 %s102, 1
    %s107 = sld [smem:[#allocation4 + %s106]]
    %s108 = scalar_lea.vmem [#allocation5], %s107
    %v109 = vld [vmem:[%s108] sm:$0x1]
    %v110 = vadd.f32 %v105, %v109
    %s111 = sadd.s32 %s102, 2
    %s112 = sld [smem:[#allocation4 + %s111]]
    %s113 = scalar_lea.vmem [#allocation5], %s112
    %v114 = vld [vmem:[%s113] sm:$0x1]
    %v115 = vadd.f32 %v110, %v114
    %s116 = sadd.s32 %s102, 3
    %s117 = sld [smem:[#allocation4 + %s116]]
    %s118 = scalar_lea.vmem [#allocation5], %s117
    %v119 = vld [vmem:[%s118] sm:$0x1]
    %v120 = vadd.f32 %v115, %v119
    %121 = vst [vmem:[#allocation2 + $0x2] sm:$0x1] %v120
    %s122 = sadd.s32 %s59, 3
    %s123 = smul.u32 %s122, 128
    %s124 = sld [smem:[#allocation4 + %s123]]
    %s125 = scalar_lea.vmem [#allocation5], %s124
    %v126 = vld [vmem:[%s125] sm:$0x1]
    %s127 = sadd.s32 %s123, 1
    %s128 = sld [smem:[#allocation4 + %s127]]
    %s129 = scalar_lea.vmem [#allocation5], %s128
    %v130 = vld [vmem:[%s129] sm:$0x1]
    %v131 = vadd.f32 %v126, %v130
    %s132 = sadd.s32 %s123, 2
    %s133 = sld [smem:[#allocation4 + %s132]]
    %s134 = scalar_lea.vmem [#allocation5], %s133
    %v135 = vld [vmem:[%s134] sm:$0x1]
    %v136 = vadd.f32 %v131, %v135
    %s137 = sadd.s32 %s123, 3
    %s138 = sld [smem:[#allocation4 + %s137]]
    %s139 = scalar_lea.vmem [#allocation5], %s138
    %v140 = vld [vmem:[%s139] sm:$0x1]
    %v141 = vadd.f32 %v136, %v140
    %142 = vst [vmem:[#allocation2 + $0x3] sm:$0x1] %v141
    %s143 = sadd.s32 %s59, 4
    %s144 = smul.u32 %s143, 128
    %s145 = sld [smem:[#allocation4 + %s144]]
    %s146 = scalar_lea.vmem [#allocation5], %s145
    %v147 = vld [vmem:[%s146] sm:$0x1]
    %s148 = sadd.s32 %s144, 1
    %s149 = sld [smem:[#allocation4 + %s148]]
    %s150 = scalar_lea.vmem [#allocation5], %s149
    %v151 = vld [vmem:[%s150] sm:$0x1]
    %v152 = vadd.f32 %v147, %v151
    %s153 = sadd.s32 %s144, 2
    %s154 = sld [smem:[#allocation4 + %s153]]
    %s155 = scalar_lea.vmem [#allocation5], %s154
    %v156 = vld [vmem:[%s155] sm:$0x1]
    %v157 = vadd.f32 %v152, %v156
    %s158 = sadd.s32 %s144, 3
    %s159 = sld [smem:[#allocation4 + %s158]]
    %s160 = scalar_lea.vmem [#allocation5], %s159
    %v161 = vld [vmem:[%s160] sm:$0x1]
    %v162 = vadd.f32 %v157, %v161
    %163 = vst [vmem:[#allocation2 + $0x4] sm:$0x1] %v162
    %s164 = sadd.s32 %s59, 5
    %s165 = smul.u32 %s164, 128
    %s166 = sld [smem:[#allocation4 + %s165]]
    %s167 = scalar_lea.vmem [#allocation5], %s166
    %v168 = vld [vmem:[%s167] sm:$0x1]
    %s169 = sadd.s32 %s165, 1
    %s170 = sld [smem:[#allocation4 + %s169]]
    %s171 = scalar_lea.vmem [#allocation5], %s170
    %v172 = vld [vmem:[%s171] sm:$0x1]
    %v173 = vadd.f32 %v168, %v172
    %s174 = sadd.s32 %s165, 2
    %s175 = sld [smem:[#allocation4 + %s174]]
    %s176 = scalar_lea.vmem [#allocation5], %s175
    %v177 = vld [vmem:[%s176] sm:$0x1]
    %v178 = vadd.f32 %v173, %v177
    %s179 = sadd.s32 %s165, 3
    %s180 = sld [smem:[#allocation4 + %s179]]
    %s181 = scalar_lea.vmem [#allocation5], %s180
    %v182 = vld [vmem:[%s181] sm:$0x1]
    %v183 = vadd.f32 %v178, %v182
    %184 = vst [vmem:[#allocation2 + $0x5] sm:$0x1] %v183
    %s185 = sadd.s32 %s59, 6
    %s186 = smul.u32 %s185, 128
    %s187 = sld [smem:[#allocation4 + %s186]]
    %s188 = scalar_lea.vmem [#allocation5], %s187
    %v189 = vld [vmem:[%s188] sm:$0x1]
    %s190 = sadd.s32 %s186, 1
    %s191 = sld [smem:[#allocation4 + %s190]]
    %s192 = scalar_lea.vmem [#allocation5], %s191
    %v193 = vld [vmem:[%s192] sm:$0x1]
    %v194 = vadd.f32 %v189, %v193
    %s195 = sadd.s32 %s186, 2
    %s196 = sld [smem:[#allocation4 + %s195]]
    %s197 = scalar_lea.vmem [#allocation5], %s196
    %v198 = vld [vmem:[%s197] sm:$0x1]
    %v199 = vadd.f32 %v194, %v198
    %s200 = sadd.s32 %s186, 3
    %s201 = sld [smem:[#allocation4 + %s200]]
    %s202 = scalar_lea.vmem [#allocation5], %s201
    %v203 = vld [vmem:[%s202] sm:$0x1]
    %v204 = vadd.f32 %v199, %v203
    %205 = vst [vmem:[#allocation2 + $0x6] sm:$0x1] %v204
    %s206 = sadd.s32 %s59, 7
    %s207 = smul.u32 %s206, 128
    %s208 = sld [smem:[#allocation4 + %s207]]
    %s209 = scalar_lea.vmem [#allocation5], %s208
    %v210 = vld [vmem:[%s209] sm:$0x1]
    %s211 = sadd.s32 %s207, 1
    %s212 = sld [smem:[#allocation4 + %s211]]
    %s213 = scalar_lea.vmem [#allocation5], %s212
    %v214 = vld [vmem:[%s213] sm:$0x1]
    %v215 = vadd.f32 %v210, %v214
    %s216 = sadd.s32 %s207, 2
    %s217 = sld [smem:[#allocation4 + %s216]]
    %s218 = scalar_lea.vmem [#allocation5], %s217
    %v219 = vld [vmem:[%s218] sm:$0x1]
    %v220 = vadd.f32 %v215, %v219
    %s221 = sadd.s32 %s207, 3
    %s222 = sld [smem:[#allocation4 + %s221]]
    %s223 = scalar_lea.vmem [#allocation5], %s222
    %v224 = vld [vmem:[%s223] sm:$0x1]
    %v225 = vadd.f32 %v220, %v224
    %226 = vst [vmem:[#allocation2 + $0x7] sm:$0x1] %v225
    %v227 = vld [vmem:[#allocation2] sm:$0xff]
    %v228 = vld [vmem:[%s2] sm:$0x1]
    %v230 = vperm.slane %v228, 0
    %v232 = vadd.f32 %v227, %v230
    %v233 = vmax.f32 %v232, 0.0
    %v234 = vld [vmem:[#allocation8] sm:$0xff]
    %v235 = vld [vmem:[#allocation8 + $0x8] sm:$0xff]
    %v236 = vld [vmem:[#allocation8 + $0x10] sm:$0xff]
    %v237 = vld [vmem:[#allocation8 + $0x18] sm:$0xff]
    %v238 = vld [vmem:[#allocation8 + $0x20] sm:$0xff]
    %v239 = vld [vmem:[#allocation8 + $0x28] sm:$0xff]
    %v240 = vld [vmem:[#allocation8 + $0x30] sm:$0xff]
    %v241 = vld [vmem:[#allocation8 + $0x38] sm:$0xff]
    %v242 = vld [vmem:[#allocation8 + $0x40] sm:$0xff]
    %v243 = vld [vmem:[#allocation8 + $0x48] sm:$0xff]
    %v244 = vld [vmem:[#allocation8 + $0x50] sm:$0xff]
    %v245 = vld [vmem:[#allocation8 + $0x58] sm:$0xff]
    %v246 = vld [vmem:[#allocation8 + $0x60] sm:$0xff]
    %v247 = vld [vmem:[#allocation8 + $0x68] sm:$0xff]
    %v248 = vld [vmem:[#allocation8 + $0x70] sm:$0xff]
    %v249 = vld [vmem:[#allocation8 + $0x78] sm:$0xff]
    %v250 = vld [vmem:[%s4] sm:$0x1]
    %v252 = vperm.slane %v250, 0
    %254 = vmatpush.msra.mxu0 %v249
    %255 = vmatpush.msra.mxu0 %v248
    %256 = vmatpush.msra.mxu0 %v247
    %257 = vmatpush.msra.mxu0 %v246
    %258 = vmatpush.msra.mxu0 %v245
    %259 = vmatpush.msra.mxu0 %v244
    %260 = vmatpush.msra.mxu0 %v243
    %261 = vmatpush.msra.mxu0 %v242
    %262 = vmatpush.msra.mxu0 %v241
    %263 = vmatpush.msra.mxu0 %v240
    %264 = vmatpush.msra.mxu0 %v239
    %265 = vmatpush.msra.mxu0 %v238
    %266 = vmatpush.msra.mxu0 %v237
    %267 = vmatpush.msra.mxu0 %v236
    %268 = vmatpush.msra.mxu0 %v235
    %269 = vmatpush.msra.mxu0 %v234
    %270 = vmatmul.f32.gmra.mxu0 %v233
    %v271 = vpop.f32.mrf.mxu0
    %v272 = vadd.f32 %v252, %v271
    %273 = vdwg.mxu0
    %274 = vmax.xlane.f32.xlu0 %v272
    %v275 = vpop.xlane.xlu0 %274
    %v276 = vsub.f32 %v272, %v275
    %v277 = vmul.f32 %v276, 1.442695
    %v278 = vpow.pop %v277
    %279 = vadd.xlane.f32.xlu0 %v278
    %v280 = vpop.xlane.xlu0 %279
    %v281 = vlog2.pop %v280
    %v282 = vmul.f32 %v281, 0.6931472
    %v283 = vsub.f32 %v276, %v282
    %284 = vst [vmem:[#allocation10] sm:$0xff] %v283
    // Predicated region
    $region26: #{tpu_custom_call.1} parent=1 // pred_check
      _
    $region27: #{tpu_custom_call.1} parent=1 // pred_check_branch
      %286 = sbr.rel (0) target = $region29
    $region28: #{tpu_custom_call.1} parent=1 // pred_region
      %288 = vsyncadd [#allocation7], 0
      %s290 = sshll.u32 [#allocation10], 4
      %s291 = int_to_ptr.vmem [resolvable:$true] %s290
      %s292 = sshll.u32 %s5, 4
      %s293 = int_to_ptr.hbm [resolvable:$true] %s292
      %295 = dma.vmem_to_hbm [thread:$0]  %s291, 128, %s293, [#allocation7]
    $region29: #{tpu_custom_call.1} parent=1 // pred_fallthru
      _
    // Predicated region
    $region30: #{tpu_custom_call.1} parent=1 // pred_check
      _
    $region31: #{tpu_custom_call.1} parent=1 // pred_check_branch
      %297 = sbr.rel (0) target = $region33
    $region32: #{tpu_custom_call.1} parent=1 // pred_region
      %299 = dma.done [#allocation7], 128
    $region33: #{tpu_custom_call.1} parent=1 // pred_fallthru
      _
    %300 = vsyncpa [#allocation6], 1
    %301 = vsyncpa [#allocation9], 1
    %302 = vsyncpa [#allocation7], 1

</llo_original>
